<compile_context>
chip_gen: v6e
topology: v6e:2x2x1
jax: 0.10.0
libtpu: 0.0.40
codegen_flags: <defaults>
</compile_context>

<pallas_src>
import functools

import jax
import jax.numpy as jnp
from jax import lax
from jax.experimental import pallas as pl
from jax.experimental.pallas import tpu as pltpu

KH = KW = 3
STRIDE = 2


def compute_padding(out_size, in_size, kernel, stride):
    # padding p such that floor((in + 2p - k)/s) + 1 == out  (matches module).
    need = (out_size - 1) * stride + kernel - in_size
    return max((need + 1) // 2, 0)


def _pick_tile_co(cout, want):
    """Largest multiple of 8 <= `want` that divides cout; else cout (untiled)."""
    if want is None or cout <= want or cout % 8 != 0:
        return cout
    t = (min(want, cout) // 8) * 8
    while t >= 8:
        if cout % t == 0:
            return t
        t -= 8
    return cout


def _make_kernel(Ho, Wo, Cin, Cout, Cres, tile_co):
    HW = Ho * Wo
    jco = Cout // tile_co

    def kernel(x_ref, w_ref, b_ref, r_ref, o_ref):
        # x_ref: (Ho+1, 2, Wo+1, 2*Cin)  phase-split zero-padded input (compute dtype)
        # w_ref: (9, tile_co, Cin)       folded conv-weight block (compute dtype)
        # b_ref: (tile_co, 1)            f32 bias block
        # r_ref: (Cres, HW)              residual, NCHW with spatial flattened
        # o_ref: (Cout + Cres, HW)       output block, VMEM-resident across j
        j = pl.program_id(1)

        # 3x3 stride-2 conv as 9 MXU matmuls (K = Cin) accumulated in f32.
        # Tap (kh, kw): padded input pixel (2*ho+kh, 2*wo+kw) lives at
        # row-pair ho + kh//2, row-phase kh%2, col-pair wo + kw//2 and channel
        # offset (kw%2)*Cin of the phase-split layout -> a contiguous slice.
        acc = jnp.zeros((tile_co, HW), jnp.float32)
        for kh in range(KH):
            dh, ph = kh // 2, kh % 2
            for kw in range(KW):
                dw, pw = kw // 2, kw % 2
                tap = x_ref[dh:dh + Ho, ph:ph + 1, dw:dw + Wo,
                            pw * Cin:(pw + 1) * Cin]
                tap2d = tap.reshape(HW, Cin)          # layout-trivial (Wo % 8 == 0)
                # (tile_co, Cin) x (HW, Cin)^T -> (tile_co, HW): the result is
                # already channel-major, so no transposes anywhere.
                acc = acc + lax.dot_general(
                    w_ref[kh * KW + kw], tap2d,
                    dimension_numbers=(((1,), (1,)), ((), ())),
                    preferred_element_type=jnp.float32)
        acc = acc + b_ref[...]                        # exact f32 bias add
        e1_block = acc.astype(o_ref.dtype)

        # Dropout(p=0) == identity; Concatenate(n_divs=1) == channel concat,
        # realised as two full-lane-width stores into the resident block.
        if jco == 1:
            o_ref[0:Cout, :] = e1_block
            o_ref[Cout:Cout + Cres, :] = r_ref[...].astype(o_ref.dtype)
        else:
            for jj in range(jco):                     # static, unrolled stores
                @pl.when(j == jj)
                def _(jj=jj):
                    o_ref[jj * tile_co:(jj + 1) * tile_co, :] = e1_block

            @pl.when(j == 0)                          # residual written once/image
            def _():
                o_ref[Cout:Cout + Cres, :] = r_ref[...].astype(o_ref.dtype)

    return kernel


@functools.partial(
    jax.jit,
    static_argnames=("compute_dtype", "out_dtype", "tile_co", "vmem_limit_bytes"))
def projection_shortcut(x_nchw, residual_nchw, weight_oihw, bias, *,
                        compute_dtype=jnp.bfloat16, out_dtype=None,
                        tile_co=256, vmem_limit_bytes=None):
    """ProjectionShortcut.forward((input_I, residual_R)); real conv, n_divs=1."""
    N, Cin, H, W = x_nchw.shape
    Nr, Cres, Ho, Wo = residual_nchw.shape
    assert N == Nr
    Cout, Cin_w, kh_, kw_ = weight_oihw.shape
    assert Cin_w == Cin and (kh_, kw_) == (KH, KW)
    if out_dtype is None:
        out_dtype = x_nchw.dtype

    pH = compute_padding(Ho, H, KH, STRIDE)
    pW = compute_padding(Wo, W, KW, STRIDE)

    # ---- wrapper-side layout: ONE relayout pass over x, everything else is a
    #      free row-major reshape (no extra HBM round trips). ----
    # TODO(synk): if the surrounding model is NHWC-native, feed NHWC directly
    #             and drop this transpose as well.
    x = jnp.transpose(x_nchw, (0, 2, 3, 1))                  # NHWC
    Hp, Wp = 2 * (Ho + 1), 2 * (Wo + 1)
    bot, rgt = Hp - H - pH, Wp - W - pW
    # Top/left pads equal the module's symmetric conv padding; the extra
    # bottom/right rows/cols beyond what Conv2d pads are never sampled by any
    # 3x3/stride-2 window, so semantics match exactly.
    assert bot >= 0 and rgt >= 0, "invalid conv geometry"
    x = jnp.pad(x, ((0, 0), (pH, bot), (pW, rgt), (0, 0)))
    # Free reshape: (N, Hp, Wp, Cin) -> (N, Ho+1, 2, Wo+1, 2*Cin).  The column
    # phase lands in the lane (channel) dim, so every conv tap is contiguous.
    x = x.reshape(N, Ho + 1, 2, Wo + 1, 2 * Cin).astype(compute_dtype)

    # Fold weights OIHW -> (KH*KW, Cout, Cin); bias -> (Cout, 1) f32.
    w = jnp.transpose(weight_oihw, (2, 3, 0, 1)).reshape(KH * KW, Cout, Cin)
    w = w.astype(compute_dtype)
    b = bias.reshape(Cout, 1).astype(jnp.float32)

    # Residual: NCHW with spatial flattened -- a free reshape, no transpose.
    HW = Ho * Wo
    r = residual_nchw.reshape(N, Cres, HW)

    tco = _pick_tile_co(Cout, tile_co)
    jco = Cout // tco
    Ctot = Cout + Cres

    kernel = _make_kernel(Ho, Wo, Cin, Cout, Cres, tco)

    cp_kwargs = dict(dimension_semantics=("parallel", "arbitrary"))
    if vmem_limit_bytes is not None:
        cp_kwargs["vmem_limit_bytes"] = vmem_limit_bytes

    out = pl.pallas_call(
        kernel,
        out_shape=jax.ShapeDtypeStruct((N, Ctot, HW), out_dtype),
        grid_spec=pltpu.PrefetchScalarGridSpec(
            num_scalar_prefetch=0,
            grid=(N, jco),
            in_specs=[
                pl.BlockSpec((None, Ho + 1, 2, Wo + 1, 2 * Cin),
                             lambda n, j: (n, 0, 0, 0, 0)),
                pl.BlockSpec((KH * KW, tco, Cin), lambda n, j: (0, j, 0)),
                pl.BlockSpec((tco, 1), lambda n, j: (j, 0)),
                pl.BlockSpec((None, Cres, HW), lambda n, j: (n, 0, 0)),
            ],
            out_specs=pl.BlockSpec((None, Ctot, HW), lambda n, j: (n, 0, 0)),
        ),
        compiler_params=pltpu.CompilerParams(**cp_kwargs),
    )(x, w, b, r)

    # Free reshape back to NCHW -- the kernel already wrote channel-major.
    return out.reshape(N, Ctot, Ho, Wo)


def _reference(x, weight, bias, residual, Ho, Wo, op_dtype):
    """Same semantics as the PyTorch forward (conv in op_dtype, f32 accum)."""
    _, _, H, W = x.shape
    pH = compute_padding(Ho, H, KH, STRIDE)
    pW = compute_padding(Wo, W, KW, STRIDE)
    e1 = lax.conv_general_dilated(
        x.astype(op_dtype), weight.astype(op_dtype),
        window_strides=(STRIDE, STRIDE), padding=((pH, pH), (pW, pW)),
        dimension_numbers=("NCHW", "OIHW", "NCHW"),
        preferred_element_type=jnp.float32,
    ).astype(jnp.float32) + bias[None, :, None, None]
    return jnp.concatenate([e1, residual.astype(jnp.float32)], axis=1)


if __name__ == "__main__":
    keys = jax.random.split(jax.random.PRNGKey(0), 8)

    # ---- case 1: toy shapes, bf16 MXU operands, untiled Cout (jco == 1) ----
    N, Cin, H, W = 2, 4, 16, 16
    featmaps, Ho, Wo = 8, 8, 8
    Cres = Cin
    x = jax.random.normal(keys[0], (N, Cin, H, W), dtype=jnp.float32)
    residual = jax.random.normal(keys[1], (N, Cres, Ho, Wo), dtype=jnp.float32)
    weight = 0.1 * jax.random.normal(keys[2], (featmaps, Cin, KH, KW), jnp.float32)
    bias = 0.1 * jax.random.normal(keys[3], (featmaps,), jnp.float32)

    out = jax.block_until_ready(projection_shortcut(x, residual, weight, bias))
    assert out.shape == (N, featmaps + Cres, Ho, Wo), out.shape
    ref_bf = _reference(x, weight, bias, residual, Ho, Wo, jnp.bfloat16)
    ref_f32 = _reference(x, weight, bias, residual, Ho, Wo, jnp.float32)
    assert jnp.allclose(out, ref_bf, atol=2e-3, rtol=2e-3), \
        float(jnp.max(jnp.abs(out - ref_bf)))
    assert jnp.allclose(out, ref_f32, atol=5e-2, rtol=5e-2), \
        float(jnp.max(jnp.abs(out - ref_f32)))

    # ---- case 2: exercises the Cout-tiled path (jco == 2) in full f32 ----
    N2, Cin2, H2, W2 = 2, 8, 16, 16
    featmaps2, Ho2, Wo2 = 16, 8, 8
    Cres2 = Cin2
    x2 = jax.random.normal(keys[4], (N2, Cin2, H2, W2), dtype=jnp.float32)
    residual2 = jax.random.normal(keys[5], (N2, Cres2, Ho2, Wo2), dtype=jnp.float32)
    weight2 = 0.1 * jax.random.normal(keys[6], (featmaps2, Cin2, KH, KW), jnp.float32)
    bias2 = 0.1 * jax.random.normal(keys[7], (featmaps2,), jnp.float32)

    out2 = jax.block_until_ready(
        projection_shortcut(x2, residual2, weight2, bias2,
                            compute_dtype=jnp.float32, tile_co=8))
    assert out2.shape == (N2, featmaps2 + Cres2, Ho2, Wo2), out2.shape
    ref2 = _reference(x2, weight2, bias2, residual2, Ho2, Wo2, jnp.float32)
    assert jnp.allclose(out2, ref2, atol=1e-4, rtol=1e-4), \
        float(jnp.max(jnp.abs(out2 - ref2)))

    print("KERNEL_OK")
</pallas_src>

<mosaic_0001>
module attributes {stable_mosaic.version = 11 : i64} {
  func.func @kernel(%arg0: i32, %arg1: i32, %arg2: memref<1x9x2x9x8xbf16, #tpu.memory_space<vmem>>, %arg3: memref<9x8x4xbf16, #tpu.memory_space<vmem>>, %arg4: memref<8x1xf32, #tpu.memory_space<vmem>>, %arg5: memref<1x4x64xf32, #tpu.memory_space<vmem>>, %arg6: memref<1x12x64xf32, #tpu.memory_space<vmem>>) attributes {dimension_semantics = [#tpu.dimension_semantics<parallel>, #tpu.dimension_semantics<arbitrary>], iteration_bounds = array<i64: 2, 1>, scalar_prefetch = 0 : i64, scratch_operands = 0 : i64, tpu.core_type = #tpu.core_type<tc>, window_params = [{transform_indices = @transform_0, window_bounds = array<i64: 1, 9, 2, 9, 8>}, {transform_indices = @transform_1, window_bounds = array<i64: 9, 8, 4>}, {transform_indices = @transform_2, window_bounds = array<i64: 8, 1>}, {transform_indices = @transform_3, window_bounds = array<i64: 1, 4, 64>}, {transform_indices = @transform_4, window_bounds = array<i64: 1, 12, 64>}]} {
    %cst = arith.constant 0.000000e+00 : f32
    %0 = vector.broadcast %cst : f32 to vector<8x64xf32>
    %c0 = arith.constant 0 : index
    %c0_0 = arith.constant 0 : index
    %c0_1 = arith.constant 0 : index
    %c0_2 = arith.constant 0 : index
    %c0_3 = arith.constant 0 : index
    %1 = vector.load %arg2[%c0, %c0_0, %c0_1, %c0_2, %c0_3] : memref<1x9x2x9x8xbf16, #tpu.memory_space<vmem>>, vector<1x8x1x8x4xbf16>
    %2 = vector.shape_cast %1 : vector<1x8x1x8x4xbf16> to vector<8x1x8x4xbf16>
    %3 = vector.shape_cast %2 : vector<8x1x8x4xbf16> to vector<64x4xbf16>
    %c0_4 = arith.constant 0 : index
    %c0_5 = arith.constant 0 : index
    %c0_6 = arith.constant 0 : index
    %4 = vector.load %arg3[%c0_4, %c0_5, %c0_6] : memref<9x8x4xbf16, #tpu.memory_space<vmem>>, vector<1x8x4xbf16>
    %5 = vector.shape_cast %4 : vector<1x8x4xbf16> to vector<8x4xbf16>
    %cst_7 = arith.constant dense<0.000000e+00> : vector<8x64xf32>
    %6 = tpu.matmul %5, %3, %cst_7 {dimension_numbers = #tpu.dot_dimension_numbers<[1], [1], [0], [0], [0, 0, 1, 0], [], []>} : vector<8x4xbf16>, vector<64x4xbf16>, vector<8x64xf32> -> vector<8x64xf32>
    %7 = arith.addf %0, %6 : vector<8x64xf32>
    %c0_8 = arith.constant 0 : index
    %c0_9 = arith.constant 0 : index
    %c0_10 = arith.constant 0 : index
    %c0_11 = arith.constant 0 : index
    %c4 = arith.constant 4 : index
    %8 = vector.load %arg2[%c0_8, %c0_9, %c0_10, %c0_11, %c4] : memref<1x9x2x9x8xbf16, #tpu.memory_space<vmem>>, vector<1x8x1x8x4xbf16>
    %9 = vector.shape_cast %8 : vector<1x8x1x8x4xbf16> to vector<8x1x8x4xbf16>
    %10 = vector.shape_cast %9 : vector<8x1x8x4xbf16> to vector<64x4xbf16>
    %c1 = arith.constant 1 : index
    %c0_12 = arith.constant 0 : index
    %c0_13 = arith.constant 0 : index
    %11 = vector.load %arg3[%c1, %c0_12, %c0_13] : memref<9x8x4xbf16, #tpu.memory_space<vmem>>, vector<1x8x4xbf16>
    %12 = vector.shape_cast %11 : vector<1x8x4xbf16> to vector<8x4xbf16>
    %cst_14 = arith.constant dense<0.000000e+00> : vector<8x64xf32>
    %13 = tpu.matmul %12, %10, %cst_14 {dimension_numbers = #tpu.dot_dimension_numbers<[1], [1], [0], [0], [0, 0, 1, 0], [], []>} : vector<8x4xbf16>, vector<64x4xbf16>, vector<8x64xf32> -> vector<8x64xf32>
    %14 = arith.addf %7, %13 : vector<8x64xf32>
    %c0_15 = arith.constant 0 : index
    %c0_16 = arith.constant 0 : index
    %c0_17 = arith.constant 0 : index
    %c1_18 = arith.constant 1 : index
    %c0_19 = arith.constant 0 : index
    %15 = vector.load %arg2[%c0_15, %c0_16, %c0_17, %c1_18, %c0_19] : memref<1x9x2x9x8xbf16, #tpu.memory_space<vmem>>, vector<1x8x1x8x4xbf16>
    %16 = vector.shape_cast %15 : vector<1x8x1x8x4xbf16> to vector<8x1x8x4xbf16>
    %17 = vector.shape_cast %16 : vector<8x1x8x4xbf16> to vector<64x4xbf16>
    %c2 = arith.constant 2 : index
    %c0_20 = arith.constant 0 : index
    %c0_21 = arith.constant 0 : index
    %18 = vector.load %arg3[%c2, %c0_20, %c0_21] : memref<9x8x4xbf16, #tpu.memory_space<vmem>>, vector<1x8x4xbf16>
    %19 = vector.shape_cast %18 : vector<1x8x4xbf16> to vector<8x4xbf16>
    %cst_22 = arith.constant dense<0.000000e+00> : vector<8x64xf32>
    %20 = tpu.matmul %19, %17, %cst_22 {dimension_numbers = #tpu.dot_dimension_numbers<[1], [1], [0], [0], [0, 0, 1, 0], [], []>} : vector<8x4xbf16>, vector<64x4xbf16>, vector<8x64xf32> -> vector<8x64xf32>
    %21 = arith.addf %14, %20 : vector<8x64xf32>
    %c0_23 = arith.constant 0 : index
    %c0_24 = arith.constant 0 : index
    %c1_25 = arith.constant 1 : index
    %c0_26 = arith.constant 0 : index
    %c0_27 = arith.constant 0 : index
    %22 = vector.load %arg2[%c0_23, %c0_24, %c1_25, %c0_26, %c0_27] : memref<1x9x2x9x8xbf16, #tpu.memory_space<vmem>>, vector<1x8x1x8x4xbf16>
    %23 = vector.shape_cast %22 : vector<1x8x1x8x4xbf16> to vector<8x1x8x4xbf16>
    %24 = vector.shape_cast %23 : vector<8x1x8x4xbf16> to vector<64x4xbf16>
    %c3 = arith.constant 3 : index
    %c0_28 = arith.constant 0 : index
    %c0_29 = arith.constant 0 : index
    %25 = vector.load %arg3[%c3, %c0_28, %c0_29] : memref<9x8x4xbf16, #tpu.memory_space<vmem>>, vector<1x8x4xbf16>
    %26 = vector.shape_cast %25 : vector<1x8x4xbf16> to vector<8x4xbf16>
    %cst_30 = arith.constant dense<0.000000e+00> : vector<8x64xf32>
    %27 = tpu.matmul %26, %24, %cst_30 {dimension_numbers = #tpu.dot_dimension_numbers<[1], [1], [0], [0], [0, 0, 1, 0], [], []>} : vector<8x4xbf16>, vector<64x4xbf16>, vector<8x64xf32> -> vector<8x64xf32>
    %28 = arith.addf %21, %27 : vector<8x64xf32>
    %c0_31 = arith.constant 0 : index
    %c0_32 = arith.constant 0 : index
    %c1_33 = arith.constant 1 : index
    %c0_34 = arith.constant 0 : index
    %c4_35 = arith.constant 4 : index
    %29 = vector.load %arg2[%c0_31, %c0_32, %c1_33, %c0_34, %c4_35] : memref<1x9x2x9x8xbf16, #tpu.memory_space<vmem>>, vector<1x8x1x8x4xbf16>
    %30 = vector.shape_cast %29 : vector<1x8x1x8x4xbf16> to vector<8x1x8x4xbf16>
    %31 = vector.shape_cast %30 : vector<8x1x8x4xbf16> to vector<64x4xbf16>
    %c4_36 = arith.constant 4 : index
    %c0_37 = arith.constant 0 : index
    %c0_38 = arith.constant 0 : index
    %32 = vector.load %arg3[%c4_36, %c0_37, %c0_38] : memref<9x8x4xbf16, #tpu.memory_space<vmem>>, vector<1x8x4xbf16>
    %33 = vector.shape_cast %32 : vector<1x8x4xbf16> to vector<8x4xbf16>
    %cst_39 = arith.constant dense<0.000000e+00> : vector<8x64xf32>
    %34 = tpu.matmul %33, %31, %cst_39 {dimension_numbers = #tpu.dot_dimension_numbers<[1], [1], [0], [0], [0, 0, 1, 0], [], []>} : vector<8x4xbf16>, vector<64x4xbf16>, vector<8x64xf32> -> vector<8x64xf32>
    %35 = arith.addf %28, %34 : vector<8x64xf32>
    %c0_40 = arith.constant 0 : index
    %c0_41 = arith.constant 0 : index
    %c1_42 = arith.constant 1 : index
    %c1_43 = arith.constant 1 : index
    %c0_44 = arith.constant 0 : index
    %36 = vector.load %arg2[%c0_40, %c0_41, %c1_42, %c1_43, %c0_44] : memref<1x9x2x9x8xbf16, #tpu.memory_space<vmem>>, vector<1x8x1x8x4xbf16>
    %37 = vector.shape_cast %36 : vector<1x8x1x8x4xbf16> to vector<8x1x8x4xbf16>
    %38 = vector.shape_cast %37 : vector<8x1x8x4xbf16> to vector<64x4xbf16>
    %c5 = arith.constant 5 : index
    %c0_45 = arith.constant 0 : index
    %c0_46 = arith.constant 0 : index
    %39 = vector.load %arg3[%c5, %c0_45, %c0_46] : memref<9x8x4xbf16, #tpu.memory_space<vmem>>, vector<1x8x4xbf16>
    %40 = vector.shape_cast %39 : vector<1x8x4xbf16> to vector<8x4xbf16>
    %cst_47 = arith.constant dense<0.000000e+00> : vector<8x64xf32>
    %41 = tpu.matmul %40, %38, %cst_47 {dimension_numbers = #tpu.dot_dimension_numbers<[1], [1], [0], [0], [0, 0, 1, 0], [], []>} : vector<8x4xbf16>, vector<64x4xbf16>, vector<8x64xf32> -> vector<8x64xf32>
    %42 = arith.addf %35, %41 : vector<8x64xf32>
    %c0_48 = arith.constant 0 : index
    %c1_49 = arith.constant 1 : index
    %c0_50 = arith.constant 0 : index
    %c0_51 = arith.constant 0 : index
    %c0_52 = arith.constant 0 : index
    %43 = vector.load %arg2[%c0_48, %c1_49, %c0_50, %c0_51, %c0_52] : memref<1x9x2x9x8xbf16, #tpu.memory_space<vmem>>, vector<1x8x1x8x4xbf16>
    %44 = vector.shape_cast %43 : vector<1x8x1x8x4xbf16> to vector<8x1x8x4xbf16>
    %45 = vector.shape_cast %44 : vector<8x1x8x4xbf16> to vector<64x4xbf16>
    %c6 = arith.constant 6 : index
    %c0_53 = arith.constant 0 : index
    %c0_54 = arith.constant 0 : index
    %46 = vector.load %arg3[%c6, %c0_53, %c0_54] : memref<9x8x4xbf16, #tpu.memory_space<vmem>>, vector<1x8x4xbf16>
    %47 = vector.shape_cast %46 : vector<1x8x4xbf16> to vector<8x4xbf16>
    %cst_55 = arith.constant dense<0.000000e+00> : vector<8x64xf32>
    %48 = tpu.matmul %47, %45, %cst_55 {dimension_numbers = #tpu.dot_dimension_numbers<[1], [1], [0], [0], [0, 0, 1, 0], [], []>} : vector<8x4xbf16>, vector<64x4xbf16>, vector<8x64xf32> -> vector<8x64xf32>
    %49 = arith.addf %42, %48 : vector<8x64xf32>
    %c0_56 = arith.constant 0 : index
    %c1_57 = arith.constant 1 : index
    %c0_58 = arith.constant 0 : index
    %c0_59 = arith.constant 0 : index
    %c4_60 = arith.constant 4 : index
    %50 = vector.load %arg2[%c0_56, %c1_57, %c0_58, %c0_59, %c4_60] : memref<1x9x2x9x8xbf16, #tpu.memory_space<vmem>>, vector<1x8x1x8x4xbf16>
    %51 = vector.shape_cast %50 : vector<1x8x1x8x4xbf16> to vector<8x1x8x4xbf16>
    %52 = vector.shape_cast %51 : vector<8x1x8x4xbf16> to vector<64x4xbf16>
    %c7 = arith.constant 7 : index
    %c0_61 = arith.constant 0 : index
    %c0_62 = arith.constant 0 : index
    %53 = vector.load %arg3[%c7, %c0_61, %c0_62] : memref<9x8x4xbf16, #tpu.memory_space<vmem>>, vector<1x8x4xbf16>
    %54 = vector.shape_cast %53 : vector<1x8x4xbf16> to vector<8x4xbf16>
    %cst_63 = arith.constant dense<0.000000e+00> : vector<8x64xf32>
    %55 = tpu.matmul %54, %52, %cst_63 {dimension_numbers = #tpu.dot_dimension_numbers<[1], [1], [0], [0], [0, 0, 1, 0], [], []>} : vector<8x4xbf16>, vector<64x4xbf16>, vector<8x64xf32> -> vector<8x64xf32>
    %56 = arith.addf %49, %55 : vector<8x64xf32>
    %c0_64 = arith.constant 0 : index
    %c1_65 = arith.constant 1 : index
    %c0_66 = arith.constant 0 : index
    %c1_67 = arith.constant 1 : index
    %c0_68 = arith.constant 0 : index
    %57 = vector.load %arg2[%c0_64, %c1_65, %c0_66, %c1_67, %c0_68] : memref<1x9x2x9x8xbf16, #tpu.memory_space<vmem>>, vector<1x8x1x8x4xbf16>
    %58 = vector.shape_cast %57 : vector<1x8x1x8x4xbf16> to vector<8x1x8x4xbf16>
    %59 = vector.shape_cast %58 : vector<8x1x8x4xbf16> to vector<64x4xbf16>
    %c8 = arith.constant 8 : index
    %c0_69 = arith.constant 0 : index
    %c0_70 = arith.constant 0 : index
    %60 = vector.load %arg3[%c8, %c0_69, %c0_70] : memref<9x8x4xbf16, #tpu.memory_space<vmem>>, vector<1x8x4xbf16>
    %61 = vector.shape_cast %60 : vector<1x8x4xbf16> to vector<8x4xbf16>
    %cst_71 = arith.constant dense<0.000000e+00> : vector<8x64xf32>
    %62 = tpu.matmul %61, %59, %cst_71 {dimension_numbers = #tpu.dot_dimension_numbers<[1], [1], [0], [0], [0, 0, 1, 0], [], []>} : vector<8x4xbf16>, vector<64x4xbf16>, vector<8x64xf32> -> vector<8x64xf32>
    %63 = arith.addf %56, %62 : vector<8x64xf32>
    %c0_72 = arith.constant 0 : index
    %c0_73 = arith.constant 0 : index
    %64 = vector.load %arg4[%c0_72, %c0_73] : memref<8x1xf32, #tpu.memory_space<vmem>>, vector<8x1xf32>
    %65 = vector.broadcast %64 : vector<8x1xf32> to vector<8x64xf32>
    %66 = arith.addf %63, %65 : vector<8x64xf32>
    %c0_74 = arith.constant 0 : index
    %c0_75 = arith.constant 0 : index
    %c0_76 = arith.constant 0 : index
    %67 = vector.load %arg6[%c0_74, %c0_75, %c0_76] : memref<1x12x64xf32, #tpu.memory_space<vmem>>, vector<1x8x64xf32>
    %68 = vector.shape_cast %67 : vector<1x8x64xf32> to vector<8x64xf32>
    %69 = vector.shape_cast %66 : vector<8x64xf32> to vector<1x8x64xf32>
    tpu.vector_store %arg6[%c0_74, %c0_75, %c0_76], %69 {strides = array<i32>} : memref<1x12x64xf32, #tpu.memory_space<vmem>>, vector<1x8x64xf32>,
    %c0_77 = arith.constant 0 : index
    %c0_78 = arith.constant 0 : index
    %c0_79 = arith.constant 0 : index
    %70 = vector.load %arg5[%c0_77, %c0_78, %c0_79] : memref<1x4x64xf32, #tpu.memory_space<vmem>>, vector<1x4x64xf32>
    %71 = vector.shape_cast %70 : vector<1x4x64xf32> to vector<4x64xf32>
    %c0_80 = arith.constant 0 : index
    %c8_81 = arith.constant 8 : index
    %c0_82 = arith.constant 0 : index
    %72 = vector.load %arg6[%c0_80, %c8_81, %c0_82] : memref<1x12x64xf32, #tpu.memory_space<vmem>>, vector<1x4x64xf32>
    %73 = vector.shape_cast %72 : vector<1x4x64xf32> to vector<4x64xf32>
    %74 = vector.shape_cast %71 : vector<4x64xf32> to vector<1x4x64xf32>
    tpu.vector_store %arg6[%c0_80, %c8_81, %c0_82], %74 {strides = array<i32>} : memref<1x12x64xf32, #tpu.memory_space<vmem>>, vector<1x4x64xf32>,
    return
  }
  func.func @transform_0(%arg0: i32, %arg1: i32) -> (i32, i32, i32, i32, i32) {
    %c0_i32 = arith.constant 0 : i32
    %c0_i32_0 = arith.constant 0 : i32
    %c0_i32_1 = arith.constant 0 : i32
    %c0_i32_2 = arith.constant 0 : i32
    %c0_i32_3 = arith.constant 0 : i32
    return %arg0, %c0_i32, %c0_i32_0, %c0_i32_1, %c0_i32_2 : i32, i32, i32, i32, i32
  }
  func.func @transform_1(%arg0: i32, %arg1: i32) -> (i32, i32, i32) {
    %c0_i32 = arith.constant 0 : i32
    %c0_i32_0 = arith.constant 0 : i32
    %c0_i32_1 = arith.constant 0 : i32
    return %c0_i32, %arg1, %c0_i32_0 : i32, i32, i32
  }
  func.func @transform_2(%arg0: i32, %arg1: i32) -> (i32, i32) {
    %c0_i32 = arith.constant 0 : i32
    %c0_i32_0 = arith.constant 0 : i32
    return %arg1, %c0_i32 : i32, i32
  }
  func.func @transform_3(%arg0: i32, %arg1: i32) -> (i32, i32, i32) {
    %c0_i32 = arith.constant 0 : i32
    %c0_i32_0 = arith.constant 0 : i32
    %c0_i32_1 = arith.constant 0 : i32
    return %arg0, %c0_i32, %c0_i32_0 : i32, i32, i32
  }
  func.func @transform_4(%arg0: i32, %arg1: i32) -> (i32, i32, i32) {
    %c0_i32 = arith.constant 0 : i32
    %c0_i32_0 = arith.constant 0 : i32
    %c0_i32_1 = arith.constant 0 : i32
    return %arg0, %c0_i32, %c0_i32_0 : i32, i32, i32
  }
}

</mosaic_0001>

<llo_original>
// kernel: projection_shortcut.1
$region0: #{projection_shortcut.1}
  #allocation0 [shape = 'u32[]', space=smem, size = 0x4, offset = 0x4, fixed_abs, tag = 'smem constant byte address 0x4 - core index']
  #allocation1 [shape = 'u32[144,128]{1,0:T(1,128)}', space=vmem, size = 0x12000, scoped, tag = 'internal scratch']
  %s0 = inlined_call_operand.vmem [shape: bf16[2,9,2,9,8], index: 0, kind: input, shape index: {}]
  %s1 = inlined_call_operand.vmem [shape: bf16[9,8,4], index: 1, kind: input, shape index: {}]
  %s2 = inlined_call_operand.vmem [shape: f32[8,1], index: 2, kind: input, shape index: {}]
  %s3 = inlined_call_operand.vmem [shape: f32[2,4,64], index: 3, kind: input, shape index: {}]
  %s4 = inlined_call_operand.vmem [shape: f32[2,12,64], index: 4, kind: output, shape index: {}]
  %s5 = sld [smem:[#allocation0]]
  $region49: #{projection_shortcut.1} parent=0
    _
  %s7 = ssub.s32 1, %s5
  %s8 = scalar_select 0, %s7, %s5
  loop: start=0, step=1, limit=4
  $region2: #{projection_shortcut.1} parent=0 // loop_pre_header
    _
  $region3: #{projection_shortcut.1} parent=0 // loop_header
    %s10 = sphi 0, %s14
    %p11 = scmp.ge.s32.totalorder %s10, 4
    %s17 = sphi 0, %s29
    %s18 = sphi 0, %s25
    %s19 = sphi 0, %s17
    %s20 = sphi 0, %s18
    %s21 = sphi 0, %s19
    %s22 = sphi 0, %s20
    %s32 = sphi 0, %s34
    %s35 = sphi 0, %s32
    %s36 = sphi 0, %s35
    %s52 = sphi 0, %s36
    %s58 = sphi 0, %s60
    %s61 = sphi 0, %s58
    %s62 = sphi 0, %s61
    %s78 = sphi 0, %s62
    %s84 = sphi 0, %s86
    %s87 = sphi 0, %s84
    %s88 = sphi 0, %s87
    %s104 = sphi 0, %s88
    %s110 = sphi 0, %s112
    %s113 = sphi 0, %s110
    %s114 = sphi 0, %s113
    %s130 = sphi 0, %s114
    %s136 = sphi 0, %s138
    %s139 = sphi 0, %s136
    %s140 = sphi 0, %s139
    %s156 = sphi 0, %s140
  $region4: #{projection_shortcut.1} parent=0 // loop_header_branch
    %13 = sbr.rel (%p11) target = $region8
  $region5: #{projection_shortcut.1} parent=0 // loop_body
    %s15 = ssub.s32 %s10, 1
    %s16 = ssub.s32 %s10, 2
    %s23 = sadd.s32 1, %s18
    %p24 = scmp.ge.s32.totalorder %s23, 1
    %s25 = scalar_select %p24, 0, %s23
    %s26 = sadd.s32 1, %s17
    %s27 = scalar_select %p24, %s26, %s17
    %p28 = scmp.ge.s32.totalorder %s27, 2
    %s29 = scalar_select %p28, 0, %s27
    %s30 = ssub.s32 %s17, %s29
    %p31 = scmp.eq.s32.totalorder %s30, 0
    %s33 = sadd.s32 %s32, 1
    %s34 = scalar_select %p31, %s32, %s33
    %p37 = pneg %p31
    %p38 = scmp.eq.s32.totalorder %s10, 1
    %p39 = por %p37, %p38
    %p40 = scmp.ne.s32.totalorder %s32, %s35
    %p41 = scmp.eq.s32.totalorder %s10, 0
    %p42 = por %p40, %p41
    %p43 = scmp.ne.s32.totalorder %s32, %s35
    %p44 = scmp.eq.s32.totalorder %s15, 1
    %p45 = por %p43, %p44
    %p46 = scmp.ne.s32.totalorder %s35, %s36
    %p47 = scmp.eq.s32.totalorder %s15, 0
    %p48 = por %p46, %p47
    %p49 = scmp.ne.s32.totalorder %s35, %s36
    %p50 = scmp.eq.s32.totalorder %s16, 1
    %p51 = por %p49, %p50
    %p53 = scmp.ne.s32.totalorder %s36, %s52
    %p54 = scmp.eq.s32.totalorder %s16, 0
    %p55 = por %p53, %p54
    %s56 = ssub.s32 %s18, %s25
    %p57 = scmp.eq.s32.totalorder %s56, 0
    %s59 = sadd.s32 %s58, 1
    %s60 = scalar_select %p57, %s58, %s59
    %p63 = pneg %p57
    %p64 = scmp.eq.s32.totalorder %s10, 1
    %p65 = por %p63, %p64
    %p66 = scmp.ne.s32.totalorder %s58, %s61
    %p67 = scmp.eq.s32.totalorder %s10, 0
    %p68 = por %p66, %p67
    %p69 = scmp.ne.s32.totalorder %s58, %s61
    %p70 = scmp.eq.s32.totalorder %s15, 1
    %p71 = por %p69, %p70
    %p72 = scmp.ne.s32.totalorder %s61, %s62
    %p73 = scmp.eq.s32.totalorder %s15, 0
    %p74 = por %p72, %p73
    %p75 = scmp.ne.s32.totalorder %s61, %s62
    %p76 = scmp.eq.s32.totalorder %s16, 1
    %p77 = por %p75, %p76
    %p79 = scmp.ne.s32.totalorder %s62, %s78
    %p80 = scmp.eq.s32.totalorder %s16, 0
    %p81 = por %p79, %p80
    %s82 = ssub.s32 %s18, %s25
    %p83 = scmp.eq.s32.totalorder %s82, 0
    %s85 = sadd.s32 %s84, 1
    %s86 = scalar_select %p83, %s84, %s85
    %p89 = pneg %p83
    %p90 = scmp.eq.s32.totalorder %s10, 1
    %p91 = por %p89, %p90
    %p92 = scmp.ne.s32.totalorder %s84, %s87
    %p93 = scmp.eq.s32.totalorder %s10, 0
    %p94 = por %p92, %p93
    %p95 = scmp.ne.s32.totalorder %s84, %s87
    %p96 = scmp.eq.s32.totalorder %s15, 1
    %p97 = por %p95, %p96
    %p98 = scmp.ne.s32.totalorder %s87, %s88
    %p99 = scmp.eq.s32.totalorder %s15, 0
    %p100 = por %p98, %p99
    %p101 = scmp.ne.s32.totalorder %s87, %s88
    %p102 = scmp.eq.s32.totalorder %s16, 1
    %p103 = por %p101, %p102
    %p105 = scmp.ne.s32.totalorder %s88, %s104
    %p106 = scmp.eq.s32.totalorder %s16, 0
    %p107 = por %p105, %p106
    %s108 = ssub.s32 %s17, %s29
    %p109 = scmp.eq.s32.totalorder %s108, 0
    %s111 = sadd.s32 %s110, 1
    %s112 = scalar_select %p109, %s110, %s111
    %p115 = pneg %p109
    %p116 = scmp.eq.s32.totalorder %s10, 1
    %p117 = por %p115, %p116
    %p118 = scmp.ne.s32.totalorder %s110, %s113
    %p119 = scmp.eq.s32.totalorder %s10, 0
    %p120 = por %p118, %p119
    %p121 = scmp.ne.s32.totalorder %s110, %s113
    %p122 = scmp.eq.s32.totalorder %s15, 1
    %p123 = por %p121, %p122
    %p124 = scmp.ne.s32.totalorder %s113, %s114
    %p125 = scmp.eq.s32.totalorder %s15, 0
    %p126 = por %p124, %p125
    %p127 = scmp.ne.s32.totalorder %s113, %s114
    %p128 = scmp.eq.s32.totalorder %s16, 1
    %p129 = por %p127, %p128
    %p131 = scmp.ne.s32.totalorder %s114, %s130
    %p132 = scmp.eq.s32.totalorder %s16, 0
    %p133 = por %p131, %p132
    %s134 = ssub.s32 %s17, %s29
    %p135 = scmp.eq.s32.totalorder %s134, 0
    %s137 = sadd.s32 %s136, 1
    %s138 = scalar_select %p135, %s136, %s137
    %p141 = pneg %p135
    %p142 = scmp.eq.s32.totalorder %s10, 1
    %p143 = por %p141, %p142
    %p144 = scmp.ne.s32.totalorder %s136, %s139
    %p145 = scmp.eq.s32.totalorder %s10, 0
    %p146 = por %p144, %p145
    %p147 = scmp.ne.s32.totalorder %s136, %s139
    %p148 = scmp.eq.s32.totalorder %s15, 1
    %p149 = por %p147, %p148
    %p150 = scmp.ne.s32.totalorder %s139, %s140
    %p151 = scmp.eq.s32.totalorder %s15, 0
    %p152 = por %p150, %p151
    %p153 = scmp.ne.s32.totalorder %s139, %s140
    %p154 = scmp.eq.s32.totalorder %s16, 1
    %p155 = por %p153, %p154
    %p157 = scmp.ne.s32.totalorder %s140, %s156
    %p158 = scmp.eq.s32.totalorder %s16, 0
    %p159 = por %p157, %p158
    %p160 = scmp.le.s32.totalorder 1, %s10
    %p161 = scmp.lt.s32.totalorder %s10, 3
    %p162 = pnand %p160, %p161
    %p163 = pneg %p162
    // Predicated region
    $region9: #{projection_shortcut.1} parent=5 // pred_check
      _
    $region10: #{projection_shortcut.1} parent=5 // pred_check_branch
      %165 = sbr.rel (%p162) target = $region12
    $region11: #{projection_shortcut.1} parent=5 // pred_region
      %s166 = ssub.s32 %s10, 1
      // Predicated region
      $region13: #{projection_shortcut.1} parent=11 // pred_check
        %p167 = pneg %p74
      $region14: #{projection_shortcut.1} parent=11 // pred_check_branch
        %169 = sbr.rel (%p167) target = $region16
      $region15: #{projection_shortcut.1} parent=11 // pred_region
        %p170 = scmp.lt.s32.totalorder %s20, 0
        %s171 = scalar_select %p170, %s20, 0
        %s172 = smul.addr %s171, 4
        %s173 = scalar_lea.vmem %s1, %s172
      $region16: #{projection_shortcut.1} parent=11 // pred_fallthru
        _
      // Predicated region
      $region17: #{projection_shortcut.1} parent=11 // pred_check
        %p174 = pneg %p100
      $region18: #{projection_shortcut.1} parent=11 // pred_check_branch
        %176 = sbr.rel (%p174) target = $region20
      $region19: #{projection_shortcut.1} parent=11 // pred_region
        %p177 = scmp.lt.s32.totalorder %s20, 0
        %s178 = scalar_select %p177, %s20, 0
        %s179 = smul.addr %s178, 8
        %s180 = scalar_lea.vmem %s2, %s179
      $region20: #{projection_shortcut.1} parent=11 // pred_fallthru
        _
    $region12: #{projection_shortcut.1} parent=5 // pred_fallthru
      _
    %p181 = scmp.lt.s32.totalorder %s10, 2
    // Predicated region
    $region21: #{projection_shortcut.1} parent=5 // pred_check
      %p182 = pneg %p181
    $region22: #{projection_shortcut.1} parent=5 // pred_check_branch
      %184 = sbr.rel (%p182) target = $region24
    $region23: #{projection_shortcut.1} parent=5 // pred_region
      // Predicated region
      $region25: #{projection_shortcut.1} parent=23 // pred_check
        %p185 = pneg %p42
      $region26: #{projection_shortcut.1} parent=23 // pred_check_branch
        %187 = sbr.rel (%p185) target = $region28
      $region27: #{projection_shortcut.1} parent=23 // pred_region
        %p188 = scmp.lt.s32.totalorder %s17, 1
        %s189 = scalar_select %p188, %s17, 1
        %s190 = smul.addr %s189, 36
        %s191 = smul.addr %s190, 4
        %s192 = scalar_lea.vmem %s0, %s191
      $region28: #{projection_shortcut.1} parent=23 // pred_fallthru
        _
      // Predicated region
      $region29: #{projection_shortcut.1} parent=23 // pred_check
        %p193 = pneg %p120
      $region30: #{projection_shortcut.1} parent=23 // pred_check_branch
        %195 = sbr.rel (%p193) target = $region32
      $region31: #{projection_shortcut.1} parent=23 // pred_region
        %p196 = scmp.lt.s32.totalorder %s17, 1
        %s197 = scalar_select %p196, %s17, 1
        %s198 = smul.addr %s197, 4
        %s199 = scalar_lea.vmem %s3, %s198
      $region32: #{projection_shortcut.1} parent=23 // pred_fallthru
        _
    $region24: #{projection_shortcut.1} parent=5 // pred_fallthru
      _
    %p200 = scmp.le.s32.totalorder 1, %s10
    %p201 = scmp.lt.s32.totalorder %s10, 3
    %p202 = pnand %p200, %p201
    %p203 = pneg %p202
    // Predicated region
    $region33: #{projection_shortcut.1} parent=5 // pred_check
      _
    $region34: #{projection_shortcut.1} parent=5 // pred_check_branch
      %205 = sbr.rel (%p202) target = $region36
    $region35: #{projection_shortcut.1} parent=5 // pred_region
      %s206 = ssub.s32 %s10, 1
      %p207 = scmp.lt.s32.totalorder %s19, 1
      %s208 = scalar_select %p207, %s19, 1
      %s209 = smul.addr %s208, 36
      %s210 = smul.addr %s209, 4
      %s211 = scalar_lea.vmem %s0, %s210
      %p212 = pneg %p48
      %p213 = pneg %p45
      %p214 = scmp.lt.s32.totalorder %s20, 0
      %s215 = scalar_select %p214, %s20, 0
      %s216 = smul.addr %s215, 4
      %s217 = scalar_lea.vmem %s1, %s216
      %p218 = pneg %p74
      %p219 = pneg %p71
      %p220 = scmp.lt.s32.totalorder %s20, 0
      %s221 = scalar_select %p220, %s20, 0
      %s222 = smul.addr %s221, 8
      %s223 = scalar_lea.vmem %s2, %s222
      %p224 = pneg %p100
      %p225 = pneg %p97
      %p226 = scmp.lt.s32.totalorder %s19, 1
      %s227 = scalar_select %p226, %s19, 1
      %s228 = smul.addr %s227, 4
      %s229 = scalar_lea.vmem %s3, %s228
      %p230 = pneg %p126
      %p231 = pneg %p123
      %p232 = pneg %p152
      %p233 = pneg %p149
      %p234 = scmp.lt.s32.totalorder %s19, 1
      %s235 = scalar_select %p234, %s19, 1
      %s236 = smul.addr %s235, 2
      %s237 = smul.addr %s236, 8
      %s238 = scalar_lea.vmem %s4, %s237
      %p239 = scmp.lt.s32.totalorder %s19, 1
      %s240 = scalar_select %p239, %s19, 1
      %s241 = smul.addr %s240, 36
      %s242 = smul.addr %s241, 4
      %s243 = scalar_lea.vmem %s0, %s242
      %p244 = scmp.lt.s32.totalorder %s20, 0
      %s245 = scalar_select %p244, %s20, 0
      %s246 = smul.addr %s245, 4
      %s247 = scalar_lea.vmem %s1, %s246
      %p248 = scmp.lt.s32.totalorder %s20, 0
      %s249 = scalar_select %p248, %s20, 0
      %s250 = smul.addr %s249, 8
      %s251 = scalar_lea.vmem %s2, %s250
      %p252 = scmp.lt.s32.totalorder %s19, 1
      %s253 = scalar_select %p252, %s19, 1
      %s254 = smul.addr %s253, 4
      %s255 = scalar_lea.vmem %s3, %s254
      %p256 = scmp.lt.s32.totalorder %s19, 1
      %s257 = scalar_select %p256, %s19, 1
      %s258 = smul.addr %s257, 2
      %s259 = smul.addr %s258, 8
      %s260 = scalar_lea.vmem %s4, %s259
      %v262 = vld [vmem:[%s243] sm:$0xf]
      %v263 = vld [vmem:[%s243 + $0x10] sm:$0xf]
      %v264 = vld [vmem:[%s243 + $0x20] sm:$0xf]
      %v265 = vld [vmem:[%s243 + $0x30] sm:$0xf]
      %v266 = vld [vmem:[%s243 + $0x40] sm:$0xf]
      %v267 = vld [vmem:[%s243 + $0x50] sm:$0xf]
      %v268 = vld [vmem:[%s243 + $0x60] sm:$0xf]
      %v269 = vld [vmem:[%s243 + $0x70] sm:$0xf]
      %v270 = vld [vmem:[%s247] sm:$0xf]
      %s271 = scalar_lea.vmem %s247, 4
      %v272 = vld [vmem:[%s271] sm:$0xf]
      %v281 = vunpack.c.l.b16 %v262
      %v282 = vunpack.c.l.b16 %v263
      %v283 = vunpack.c.l.b16 %v264
      %v284 = vunpack.c.l.b16 %v265
      %v285 = vunpack.c.l.b16 %v266
      %v286 = vunpack.c.l.b16 %v267
      %v287 = vunpack.c.l.b16 %v268
      %v288 = vunpack.c.l.b16 %v269
      %v289 = vpack.c.b16 %v282, %v281
      %v290 = vpack.c.b16 %v284, %v283
      %v291 = vpack.c.b16 %v286, %v285
      %v292 = vpack.c.b16 %v288, %v287
      %293 = vrot.lane.b32.xlu0 %v289, 124
      %v294 = vpop.permute.xlu0 %293
      %295 = vrot.lane.b32.xlu0 %v290, 124
      %v296 = vpop.permute.xlu0 %295
      %297 = vrot.lane.b32.xlu0 %v291, 124
      %v298 = vpop.permute.xlu0 %297
      %299 = vrot.lane.b32.xlu0 %v292, 124
      %v300 = vpop.permute.xlu0 %299
      %vm301 = vcmask 31744
      %v303 = vsel %vm301, %v272, 0
      %v306 = vsel %vm301, %v294, 0
      %v309 = vsel %vm301, %v296, 0
      %v312 = vsel %vm301, %v298, 0
      %v315 = vsel %vm301, %v300, 0
      %317 = vmatprep.subr.bf16.mxu0 0
      %318 = vmatpush1.bf16.xpose.msra.mxu0 0
      %319 = vmatprep.subr.bf16.mxu0 0
      %320 = vmatpush1.bf16.xpose.msra.mxu0 0
      %321 = vmatprep.subr.bf16.mxu0 0
      %322 = vmatpush1.bf16.xpose.msra.mxu0 0
      %323 = vmatprep.subr.bf16.mxu0 0
      %324 = vmatpush1.bf16.xpose.msra.mxu0 0
      %325 = vmatprep.subr.bf16.mxu0 0
      %326 = vmatpush1.bf16.xpose.msra.mxu0 %v315
      %327 = vmatprep.subr.bf16.mxu0 0
      %328 = vmatpush1.bf16.xpose.msra.mxu0 %v312
      %329 = vmatprep.subr.bf16.mxu0 0
      %330 = vmatpush1.bf16.xpose.msra.mxu0 %v309
      %331 = vmatprep.subr.bf16.mxu0 0
      %332 = vmatpush1.bf16.xpose.msra.mxu0 %v306
      %333 = vmatprep.subr.bf16.mxu0 0
      %334 = vmatpush2.bf16.xpose.msra.mxu0 0
      %335 = vmatprep.subr.bf16.mxu0 0
      %336 = vmatpush2.bf16.xpose.msra.mxu0 0
      %337 = vmatprep.subr.bf16.mxu0 0
      %338 = vmatpush2.bf16.xpose.msra.mxu0 0
      %339 = vmatprep.subr.bf16.mxu0 0
      %340 = vmatpush2.bf16.xpose.msra.mxu0 0
      %341 = vmatprep.subr.bf16.mxu0 0
      %342 = vmatpush2.bf16.xpose.msra.mxu0 0
      %343 = vmatprep.subr.bf16.mxu0 0
      %344 = vmatpush2.bf16.xpose.msra.mxu0 0
      %345 = vmatprep.subr.bf16.mxu0 0
      %346 = vmatpush2.bf16.xpose.msra.mxu0 0
      %347 = vmatprep.subr.bf16.mxu0 0
      %348 = vmatpush2.bf16.xpose.msra.mxu0 0
      %349 = vmatprep.mubr.bf16.mxu0 0
      %350 = vmatmul.mubr.bf16.gmra.mxu0 %v303
      %v351 = vpop.f32.mrf.mxu0
      %v352 = vadd.f32 0.0, %v351
      %v353 = vpop.f32.mrf.mxu0
      %v354 = vpop.f32.mrf.mxu0
      %v355 = vpop.f32.mrf.mxu0
      %356 = vdwg.mxu0
      %v358 = vsel %vm301, %v270, 0
      %v361 = vsel %vm301, %v289, 0
      %v364 = vsel %vm301, %v290, 0
      %v367 = vsel %vm301, %v291, 0
      %v370 = vsel %vm301, %v292, 0
      %372 = vmatprep.subr.bf16.mxu0 0
      %373 = vmatpush1.bf16.xpose.msra.mxu0 0
      %374 = vmatprep.subr.bf16.mxu0 0
      %375 = vmatpush1.bf16.xpose.msra.mxu0 0
      %376 = vmatprep.subr.bf16.mxu0 0
      %377 = vmatpush1.bf16.xpose.msra.mxu0 0
      %378 = vmatprep.subr.bf16.mxu0 0
      %379 = vmatpush1.bf16.xpose.msra.mxu0 0
      %380 = vmatprep.subr.bf16.mxu0 0
      %381 = vmatpush1.bf16.xpose.msra.mxu0 %v370
      %382 = vmatprep.subr.bf16.mxu0 0
      %383 = vmatpush1.bf16.xpose.msra.mxu0 %v367
      %384 = vmatprep.subr.bf16.mxu0 0
      %385 = vmatpush1.bf16.xpose.msra.mxu0 %v364
      %386 = vmatprep.subr.bf16.mxu0 0
      %387 = vmatpush1.bf16.xpose.msra.mxu0 %v361
      %388 = vmatprep.subr.bf16.mxu0 0
      %389 = vmatpush2.bf16.xpose.msra.mxu0 0
      %390 = vmatprep.subr.bf16.mxu0 0
      %391 = vmatpush2.bf16.xpose.msra.mxu0 0
      %392 = vmatprep.subr.bf16.mxu0 0
      %393 = vmatpush2.bf16.xpose.msra.mxu0 0
      %394 = vmatprep.subr.bf16.mxu0 0
      %395 = vmatpush2.bf16.xpose.msra.mxu0 0
      %396 = vmatprep.subr.bf16.mxu0 0
      %397 = vmatpush2.bf16.xpose.msra.mxu0 0
      %398 = vmatprep.subr.bf16.mxu0 0
      %399 = vmatpush2.bf16.xpose.msra.mxu0 0
      %400 = vmatprep.subr.bf16.mxu0 0
      %401 = vmatpush2.bf16.xpose.msra.mxu0 0
      %402 = vmatprep.subr.bf16.mxu0 0
      %403 = vmatpush2.bf16.xpose.msra.mxu0 0
      %404 = vmatprep.mubr.bf16.mxu0 0
      %405 = vmatmul.mubr.bf16.gmra.mxu0 %v358
      %v406 = vpop.f32.mrf.mxu0
      %v407 = vadd.f32 %v352, %v406
      %v408 = vpop.f32.mrf.mxu0
      %v409 = vpop.f32.mrf.mxu0
      %v410 = vpop.f32.mrf.mxu0
      %411 = vdwg.mxu0
      %v412 = vld [vmem:[%s243] sm:$0xf]
      %v413 = vld [vmem:[%s243 + $0x4] sm:$0x1]
      %v414 = vld [vmem:[%s243 + $0x10] sm:$0xf]
      %v415 = vld [vmem:[%s243 + $0x14] sm:$0x1]
      %v416 = vld [vmem:[%s243 + $0x20] sm:$0xf]
      %v417 = vld [vmem:[%s243 + $0x24] sm:$0x1]
      %v418 = vld [vmem:[%s243 + $0x30] sm:$0xf]
      %v419 = vld [vmem:[%s243 + $0x34] sm:$0x1]
      %v420 = vld [vmem:[%s243 + $0x40] sm:$0xf]
      %v421 = vld [vmem:[%s243 + $0x44] sm:$0x1]
      %v422 = vld [vmem:[%s243 + $0x50] sm:$0xf]
      %v423 = vld [vmem:[%s243 + $0x54] sm:$0x1]
      %v424 = vld [vmem:[%s243 + $0x60] sm:$0xf]
      %v425 = vld [vmem:[%s243 + $0x64] sm:$0x1]
      %v426 = vld [vmem:[%s243 + $0x70] sm:$0xf]
      %v427 = vld [vmem:[%s243 + $0x74] sm:$0x1]
      %vm428 = vsmask.f32 3328
      %vm429 = vsmask.f32 7440
      %vm430 = vmor %vm428, %vm429
      %v432 = vshrl.u32 %v412, 16
      %v434 = vrot.slane %v432, 4
      %v435 = vshll.u32 %v412, 16
      %v437 = vrot.slane %v435, 5
      %v438 = vor.u32 %v434, %v437
      %v439 = vrot.slane %v438, 4
      %v441 = vshll.u32 %v413, 16
      %v443 = vrot.slane %v441, 5
      %v444 = vsel %vm430, %v439, %v443
      %v446 = vshrl.u32 %v414, 16
      %v448 = vrot.slane %v446, 4
      %v449 = vshll.u32 %v414, 16
      %v451 = vrot.slane %v449, 5
      %v452 = vor.u32 %v448, %v451
      %v453 = vrot.slane %v452, 4
      %v455 = vshll.u32 %v415, 16
      %v457 = vrot.slane %v455, 5
      %v458 = vsel %vm430, %v453, %v457
      %v460 = vshrl.u32 %v416, 16
      %v462 = vrot.slane %v460, 4
      %v463 = vshll.u32 %v416, 16
      %v465 = vrot.slane %v463, 5
      %v466 = vor.u32 %v462, %v465
      %v467 = vrot.slane %v466, 4
      %v469 = vshll.u32 %v417, 16
      %v471 = vrot.slane %v469, 5
      %v472 = vsel %vm430, %v467, %v471
      %v474 = vshrl.u32 %v418, 16
      %v476 = vrot.slane %v474, 4
      %v477 = vshll.u32 %v418, 16
      %v479 = vrot.slane %v477, 5
      %v480 = vor.u32 %v476, %v479
      %v481 = vrot.slane %v480, 4
      %v483 = vshll.u32 %v419, 16
      %v485 = vrot.slane %v483, 5
      %v486 = vsel %vm430, %v481, %v485
      %v488 = vshrl.u32 %v420, 16
      %v490 = vrot.slane %v488, 4
      %v491 = vshll.u32 %v420, 16
      %v493 = vrot.slane %v491, 5
      %v494 = vor.u32 %v490, %v493
      %v495 = vrot.slane %v494, 4
      %v497 = vshll.u32 %v421, 16
      %v499 = vrot.slane %v497, 5
      %v500 = vsel %vm430, %v495, %v499
      %v502 = vshrl.u32 %v422, 16
      %v504 = vrot.slane %v502, 4
      %v505 = vshll.u32 %v422, 16
      %v507 = vrot.slane %v505, 5
      %v508 = vor.u32 %v504, %v507
      %v509 = vrot.slane %v508, 4
      %v511 = vshll.u32 %v423, 16
      %v513 = vrot.slane %v511, 5
      %v514 = vsel %vm430, %v509, %v513
      %v516 = vshrl.u32 %v424, 16
      %v518 = vrot.slane %v516, 4
      %v519 = vshll.u32 %v424, 16
      %v521 = vrot.slane %v519, 5
      %v522 = vor.u32 %v518, %v521
      %v523 = vrot.slane %v522, 4
      %v525 = vshll.u32 %v425, 16
      %v527 = vrot.slane %v525, 5
      %v528 = vsel %vm430, %v523, %v527
      %v530 = vshrl.u32 %v426, 16
      %v532 = vrot.slane %v530, 4
      %v533 = vshll.u32 %v426, 16
      %v535 = vrot.slane %v533, 5
      %v536 = vor.u32 %v532, %v535
      %v537 = vrot.slane %v536, 4
      %v539 = vshll.u32 %v427, 16
      %v541 = vrot.slane %v539, 5
      %v542 = vsel %vm430, %v537, %v541
      %s543 = scalar_lea.vmem %s247, 8
      %v544 = vld [vmem:[%s543] sm:$0xf]
      %v545 = vunpack.c.l.b16 %v444
      %v546 = vunpack.c.l.b16 %v458
      %v547 = vunpack.c.l.b16 %v472
      %v548 = vunpack.c.l.b16 %v486
      %v549 = vunpack.c.l.b16 %v500
      %v550 = vunpack.c.l.b16 %v514
      %v551 = vunpack.c.l.b16 %v528
      %v552 = vunpack.c.l.b16 %v542
      %v553 = vpack.c.b16 %v546, %v545
      %v554 = vpack.c.b16 %v548, %v547
      %v555 = vpack.c.b16 %v550, %v549
      %v556 = vpack.c.b16 %v552, %v551
      %v558 = vsel %vm301, %v544, 0
      %v561 = vsel %vm301, %v553, 0
      %v564 = vsel %vm301, %v554, 0
      %v567 = vsel %vm301, %v555, 0
      %v570 = vsel %vm301, %v556, 0
      %572 = vmatprep.subr.bf16.mxu0 0
      %573 = vmatpush1.bf16.xpose.msra.mxu0 0
      %574 = vmatprep.subr.bf16.mxu0 0
      %575 = vmatpush1.bf16.xpose.msra.mxu0 0
      %576 = vmatprep.subr.bf16.mxu0 0
      %577 = vmatpush1.bf16.xpose.msra.mxu0 0
      %578 = vmatprep.subr.bf16.mxu0 0
      %579 = vmatpush1.bf16.xpose.msra.mxu0 0
      %580 = vmatprep.subr.bf16.mxu0 0
      %581 = vmatpush1.bf16.xpose.msra.mxu0 %v570
      %582 = vmatprep.subr.bf16.mxu0 0
      %583 = vmatpush1.bf16.xpose.msra.mxu0 %v567
      %584 = vmatprep.subr.bf16.mxu0 0
      %585 = vmatpush1.bf16.xpose.msra.mxu0 %v564
      %586 = vmatprep.subr.bf16.mxu0 0
      %587 = vmatpush1.bf16.xpose.msra.mxu0 %v561
      %588 = vmatprep.subr.bf16.mxu0 0
      %589 = vmatpush2.bf16.xpose.msra.mxu0 0
      %590 = vmatprep.subr.bf16.mxu0 0
      %591 = vmatpush2.bf16.xpose.msra.mxu0 0
      %592 = vmatprep.subr.bf16.mxu0 0
      %593 = vmatpush2.bf16.xpose.msra.mxu0 0
      %594 = vmatprep.subr.bf16.mxu0 0
      %595 = vmatpush2.bf16.xpose.msra.mxu0 0
      %596 = vmatprep.subr.bf16.mxu0 0
      %597 = vmatpush2.bf16.xpose.msra.mxu0 0
      %598 = vmatprep.subr.bf16.mxu0 0
      %599 = vmatpush2.bf16.xpose.msra.mxu0 0
      %600 = vmatprep.subr.bf16.mxu0 0
      %601 = vmatpush2.bf16.xpose.msra.mxu0 0
      %602 = vmatprep.subr.bf16.mxu0 0
      %603 = vmatpush2.bf16.xpose.msra.mxu0 0
      %604 = vmatprep.mubr.bf16.mxu0 0
      %605 = vmatmul.mubr.bf16.gmra.mxu0 %v558
      %v606 = vpop.f32.mrf.mxu0
      %v607 = vadd.f32 0.0, %v606
      %v608 = vpop.f32.mrf.mxu0
      %v609 = vpop.f32.mrf.mxu0
      %v610 = vpop.f32.mrf.mxu0
      %611 = vdwg.mxu0
      %v612 = vadd.f32 %v407, %v607
      %s613 = scalar_lea.vmem %s243, 8
      %v614 = vld [vmem:[%s613] sm:$0xf]
      %v615 = vld [vmem:[%s613 + $0x10] sm:$0xf]
      %v616 = vld [vmem:[%s613 + $0x20] sm:$0xf]
      %v617 = vld [vmem:[%s613 + $0x30] sm:$0xf]
      %v618 = vld [vmem:[%s613 + $0x40] sm:$0xf]
      %v619 = vld [vmem:[%s613 + $0x50] sm:$0xf]
      %v620 = vld [vmem:[%s613 + $0x60] sm:$0xf]
      %v621 = vld [vmem:[%s613 + $0x70] sm:$0xf]
      %s622 = scalar_lea.vmem %s247, 12
      %v623 = vld [vmem:[%s622] sm:$0xf]
      %v632 = vunpack.c.l.b16 %v614
      %v633 = vunpack.c.l.b16 %v615
      %v634 = vunpack.c.l.b16 %v616
      %v635 = vunpack.c.l.b16 %v617
      %v636 = vunpack.c.l.b16 %v618
      %v637 = vunpack.c.l.b16 %v619
      %v638 = vunpack.c.l.b16 %v620
      %v639 = vunpack.c.l.b16 %v621
      %v640 = vpack.c.b16 %v633, %v632
      %v641 = vpack.c.b16 %v635, %v634
      %v642 = vpack.c.b16 %v637, %v636
      %v643 = vpack.c.b16 %v639, %v638
      %v645 = vsel %vm301, %v623, 0
      %v648 = vsel %vm301, %v640, 0
      %v651 = vsel %vm301, %v641, 0
      %v654 = vsel %vm301, %v642, 0
      %v657 = vsel %vm301, %v643, 0
      %659 = vmatprep.subr.bf16.mxu0 0
      %660 = vmatpush1.bf16.xpose.msra.mxu0 0
      %661 = vmatprep.subr.bf16.mxu0 0
      %662 = vmatpush1.bf16.xpose.msra.mxu0 0
      %663 = vmatprep.subr.bf16.mxu0 0
      %664 = vmatpush1.bf16.xpose.msra.mxu0 0
      %665 = vmatprep.subr.bf16.mxu0 0
      %666 = vmatpush1.bf16.xpose.msra.mxu0 0
      %667 = vmatprep.subr.bf16.mxu0 0
      %668 = vmatpush1.bf16.xpose.msra.mxu0 %v657
      %669 = vmatprep.subr.bf16.mxu0 0
      %670 = vmatpush1.bf16.xpose.msra.mxu0 %v654
      %671 = vmatprep.subr.bf16.mxu0 0
      %672 = vmatpush1.bf16.xpose.msra.mxu0 %v651
      %673 = vmatprep.subr.bf16.mxu0 0
      %674 = vmatpush1.bf16.xpose.msra.mxu0 %v648
      %675 = vmatprep.subr.bf16.mxu0 0
      %676 = vmatpush2.bf16.xpose.msra.mxu0 0
      %677 = vmatprep.subr.bf16.mxu0 0
      %678 = vmatpush2.bf16.xpose.msra.mxu0 0
      %679 = vmatprep.subr.bf16.mxu0 0
      %680 = vmatpush2.bf16.xpose.msra.mxu0 0
      %681 = vmatprep.subr.bf16.mxu0 0
      %682 = vmatpush2.bf16.xpose.msra.mxu0 0
      %683 = vmatprep.subr.bf16.mxu0 0
      %684 = vmatpush2.bf16.xpose.msra.mxu0 0
      %685 = vmatprep.subr.bf16.mxu0 0
      %686 = vmatpush2.bf16.xpose.msra.mxu0 0
      %687 = vmatprep.subr.bf16.mxu0 0
      %688 = vmatpush2.bf16.xpose.msra.mxu0 0
      %689 = vmatprep.subr.bf16.mxu0 0
      %690 = vmatpush2.bf16.xpose.msra.mxu0 0
      %691 = vmatprep.mubr.bf16.mxu0 0
      %692 = vmatmul.mubr.bf16.gmra.mxu0 %v645
      %v693 = vpop.f32.mrf.mxu0
      %v694 = vadd.f32 0.0, %v693
      %v695 = vpop.f32.mrf.mxu0
      %v696 = vpop.f32.mrf.mxu0
      %v697 = vpop.f32.mrf.mxu0
      %698 = vdwg.mxu0
      %v699 = vadd.f32 %v612, %v694
      %s700 = scalar_lea.vmem %s247, 16
      %v701 = vld [vmem:[%s700] sm:$0xf]
      %702 = vrot.lane.b32.xlu0 %v640, 124
      %v703 = vpop.permute.xlu0 %702
      %704 = vrot.lane.b32.xlu0 %v641, 124
      %v705 = vpop.permute.xlu0 %704
      %706 = vrot.lane.b32.xlu0 %v642, 124
      %v707 = vpop.permute.xlu0 %706
      %708 = vrot.lane.b32.xlu0 %v643, 124
      %v709 = vpop.permute.xlu0 %708
      %v711 = vsel %vm301, %v701, 0
      %v714 = vsel %vm301, %v703, 0
      %v717 = vsel %vm301, %v705, 0
      %v720 = vsel %vm301, %v707, 0
      %v723 = vsel %vm301, %v709, 0
      %725 = vmatprep.subr.bf16.mxu0 0
      %726 = vmatpush1.bf16.xpose.msra.mxu0 0
      %727 = vmatprep.subr.bf16.mxu0 0
      %728 = vmatpush1.bf16.xpose.msra.mxu0 0
      %729 = vmatprep.subr.bf16.mxu0 0
      %730 = vmatpush1.bf16.xpose.msra.mxu0 0
      %731 = vmatprep.subr.bf16.mxu0 0
      %732 = vmatpush1.bf16.xpose.msra.mxu0 0
      %733 = vmatprep.subr.bf16.mxu0 0
      %734 = vmatpush1.bf16.xpose.msra.mxu0 %v723
      %735 = vmatprep.subr.bf16.mxu0 0
      %736 = vmatpush1.bf16.xpose.msra.mxu0 %v720
      %737 = vmatprep.subr.bf16.mxu0 0
      %738 = vmatpush1.bf16.xpose.msra.mxu0 %v717
      %739 = vmatprep.subr.bf16.mxu0 0
      %740 = vmatpush1.bf16.xpose.msra.mxu0 %v714
      %741 = vmatprep.subr.bf16.mxu0 0
      %742 = vmatpush2.bf16.xpose.msra.mxu0 0
      %743 = vmatprep.subr.bf16.mxu0 0
      %744 = vmatpush2.bf16.xpose.msra.mxu0 0
      %745 = vmatprep.subr.bf16.mxu0 0
      %746 = vmatpush2.bf16.xpose.msra.mxu0 0
      %747 = vmatprep.subr.bf16.mxu0 0
      %748 = vmatpush2.bf16.xpose.msra.mxu0 0
      %749 = vmatprep.subr.bf16.mxu0 0
      %750 = vmatpush2.bf16.xpose.msra.mxu0 0
      %751 = vmatprep.subr.bf16.mxu0 0
      %752 = vmatpush2.bf16.xpose.msra.mxu0 0
      %753 = vmatprep.subr.bf16.mxu0 0
      %754 = vmatpush2.bf16.xpose.msra.mxu0 0
      %755 = vmatprep.subr.bf16.mxu0 0
      %756 = vmatpush2.bf16.xpose.msra.mxu0 0
      %757 = vmatprep.mubr.bf16.mxu0 0
      %758 = vmatmul.mubr.bf16.gmra.mxu0 %v711
      %v759 = vpop.f32.mrf.mxu0
      %v760 = vadd.f32 0.0, %v759
      %v761 = vpop.f32.mrf.mxu0
      %v762 = vpop.f32.mrf.mxu0
      %v763 = vpop.f32.mrf.mxu0
      %764 = vdwg.mxu0
      %v765 = vadd.f32 %v699, %v760
      %v766 = vld [vmem:[%s613] sm:$0xf]
      %v767 = vld [vmem:[%s613 + $0x4] sm:$0x1]
      %v768 = vld [vmem:[%s613 + $0x10] sm:$0xf]
      %v769 = vld [vmem:[%s613 + $0x14] sm:$0x1]
      %v770 = vld [vmem:[%s613 + $0x20] sm:$0xf]
      %v771 = vld [vmem:[%s613 + $0x24] sm:$0x1]
      %v772 = vld [vmem:[%s613 + $0x30] sm:$0xf]
      %v773 = vld [vmem:[%s613 + $0x34] sm:$0x1]
      %v774 = vld [vmem:[%s613 + $0x40] sm:$0xf]
      %v775 = vld [vmem:[%s613 + $0x44] sm:$0x1]
      %v776 = vld [vmem:[%s613 + $0x50] sm:$0xf]
      %v777 = vld [vmem:[%s613 + $0x54] sm:$0x1]
      %v778 = vld [vmem:[%s613 + $0x60] sm:$0xf]
      %v779 = vld [vmem:[%s613 + $0x64] sm:$0x1]
      %v780 = vld [vmem:[%s613 + $0x70] sm:$0xf]
      %v781 = vld [vmem:[%s613 + $0x74] sm:$0x1]
      %v783 = vshrl.u32 %v766, 16
      %v785 = vrot.slane %v783, 4
      %v786 = vshll.u32 %v766, 16
      %v788 = vrot.slane %v786, 5
      %v789 = vor.u32 %v785, %v788
      %v790 = vrot.slane %v789, 4
      %v792 = vshll.u32 %v767, 16
      %v794 = vrot.slane %v792, 5
      %v795 = vsel %vm430, %v790, %v794
      %v797 = vshrl.u32 %v768, 16
      %v799 = vrot.slane %v797, 4
      %v800 = vshll.u32 %v768, 16
      %v802 = vrot.slane %v800, 5
      %v803 = vor.u32 %v799, %v802
      %v804 = vrot.slane %v803, 4
      %v806 = vshll.u32 %v769, 16
      %v808 = vrot.slane %v806, 5
      %v809 = vsel %vm430, %v804, %v808
      %v811 = vshrl.u32 %v770, 16
      %v813 = vrot.slane %v811, 4
      %v814 = vshll.u32 %v770, 16
      %v816 = vrot.slane %v814, 5
      %v817 = vor.u32 %v813, %v816
      %v818 = vrot.slane %v817, 4
      %v820 = vshll.u32 %v771, 16
      %v822 = vrot.slane %v820, 5
      %v823 = vsel %vm430, %v818, %v822
      %v825 = vshrl.u32 %v772, 16
      %v827 = vrot.slane %v825, 4
      %v828 = vshll.u32 %v772, 16
      %v830 = vrot.slane %v828, 5
      %v831 = vor.u32 %v827, %v830
      %v832 = vrot.slane %v831, 4
      %v834 = vshll.u32 %v773, 16
      %v836 = vrot.slane %v834, 5
      %v837 = vsel %vm430, %v832, %v836
      %v839 = vshrl.u32 %v774, 16
      %v841 = vrot.slane %v839, 4
      %v842 = vshll.u32 %v774, 16
      %v844 = vrot.slane %v842, 5
      %v845 = vor.u32 %v841, %v844
      %v846 = vrot.slane %v845, 4
      %v848 = vshll.u32 %v775, 16
      %v850 = vrot.slane %v848, 5
      %v851 = vsel %vm430, %v846, %v850
      %v853 = vshrl.u32 %v776, 16
      %v855 = vrot.slane %v853, 4
      %v856 = vshll.u32 %v776, 16
      %v858 = vrot.slane %v856, 5
      %v859 = vor.u32 %v855, %v858
      %v860 = vrot.slane %v859, 4
      %v862 = vshll.u32 %v777, 16
      %v864 = vrot.slane %v862, 5
      %v865 = vsel %vm430, %v860, %v864
      %v867 = vshrl.u32 %v778, 16
      %v869 = vrot.slane %v867, 4
      %v870 = vshll.u32 %v778, 16
      %v872 = vrot.slane %v870, 5
      %v873 = vor.u32 %v869, %v872
      %v874 = vrot.slane %v873, 4
      %v876 = vshll.u32 %v779, 16
      %v878 = vrot.slane %v876, 5
      %v879 = vsel %vm430, %v874, %v878
      %v881 = vshrl.u32 %v780, 16
      %v883 = vrot.slane %v881, 4
      %v884 = vshll.u32 %v780, 16
      %v886 = vrot.slane %v884, 5
      %v887 = vor.u32 %v883, %v886
      %v888 = vrot.slane %v887, 4
      %v890 = vshll.u32 %v781, 16
      %v892 = vrot.slane %v890, 5
      %v893 = vsel %vm430, %v888, %v892
      %s894 = scalar_lea.vmem %s247, 20
      %v895 = vld [vmem:[%s894] sm:$0xf]
      %v896 = vunpack.c.l.b16 %v795
      %v897 = vunpack.c.l.b16 %v809
      %v898 = vunpack.c.l.b16 %v823
      %v899 = vunpack.c.l.b16 %v837
      %v900 = vunpack.c.l.b16 %v851
      %v901 = vunpack.c.l.b16 %v865
      %v902 = vunpack.c.l.b16 %v879
      %v903 = vunpack.c.l.b16 %v893
      %v904 = vpack.c.b16 %v897, %v896
      %v905 = vpack.c.b16 %v899, %v898
      %v906 = vpack.c.b16 %v901, %v900
      %v907 = vpack.c.b16 %v903, %v902
      %v909 = vsel %vm301, %v895, 0
      %v912 = vsel %vm301, %v904, 0
      %v915 = vsel %vm301, %v905, 0
      %v918 = vsel %vm301, %v906, 0
      %v921 = vsel %vm301, %v907, 0
      %923 = vmatprep.subr.bf16.mxu0 0
      %924 = vmatpush1.bf16.xpose.msra.mxu0 0
      %925 = vmatprep.subr.bf16.mxu0 0
      %926 = vmatpush1.bf16.xpose.msra.mxu0 0
      %927 = vmatprep.subr.bf16.mxu0 0
      %928 = vmatpush1.bf16.xpose.msra.mxu0 0
      %929 = vmatprep.subr.bf16.mxu0 0
      %930 = vmatpush1.bf16.xpose.msra.mxu0 0
      %931 = vmatprep.subr.bf16.mxu0 0
      %932 = vmatpush1.bf16.xpose.msra.mxu0 %v921
      %933 = vmatprep.subr.bf16.mxu0 0
      %934 = vmatpush1.bf16.xpose.msra.mxu0 %v918
      %935 = vmatprep.subr.bf16.mxu0 0
      %936 = vmatpush1.bf16.xpose.msra.mxu0 %v915
      %937 = vmatprep.subr.bf16.mxu0 0
      %938 = vmatpush1.bf16.xpose.msra.mxu0 %v912
      %939 = vmatprep.subr.bf16.mxu0 0
      %940 = vmatpush2.bf16.xpose.msra.mxu0 0
      %941 = vmatprep.subr.bf16.mxu0 0
      %942 = vmatpush2.bf16.xpose.msra.mxu0 0
      %943 = vmatprep.subr.bf16.mxu0 0
      %944 = vmatpush2.bf16.xpose.msra.mxu0 0
      %945 = vmatprep.subr.bf16.mxu0 0
      %946 = vmatpush2.bf16.xpose.msra.mxu0 0
      %947 = vmatprep.subr.bf16.mxu0 0
      %948 = vmatpush2.bf16.xpose.msra.mxu0 0
      %949 = vmatprep.subr.bf16.mxu0 0
      %950 = vmatpush2.bf16.xpose.msra.mxu0 0
      %951 = vmatprep.subr.bf16.mxu0 0
      %952 = vmatpush2.bf16.xpose.msra.mxu0 0
      %953 = vmatprep.subr.bf16.mxu0 0
      %954 = vmatpush2.bf16.xpose.msra.mxu0 0
      %955 = vmatprep.mubr.bf16.mxu0 0
      %956 = vmatmul.mubr.bf16.gmra.mxu0 %v909
      %v957 = vpop.f32.mrf.mxu0
      %v958 = vadd.f32 0.0, %v957
      %v959 = vpop.f32.mrf.mxu0
      %v960 = vpop.f32.mrf.mxu0
      %v961 = vpop.f32.mrf.mxu0
      %962 = vdwg.mxu0
      %v963 = vadd.f32 %v765, %v958
      %s964 = scalar_lea.vmem %s243, 16
      %v965 = vld [vmem:[%s964] sm:$0xf]
      %v966 = vld [vmem:[%s964 + $0x10] sm:$0xf]
      %v967 = vld [vmem:[%s964 + $0x20] sm:$0xf]
      %v968 = vld [vmem:[%s964 + $0x30] sm:$0xf]
      %v969 = vld [vmem:[%s964 + $0x40] sm:$0xf]
      %v970 = vld [vmem:[%s964 + $0x50] sm:$0xf]
      %v971 = vld [vmem:[%s964 + $0x60] sm:$0xf]
      %v972 = vld [vmem:[%s964 + $0x70] sm:$0xf]
      %s973 = scalar_lea.vmem %s247, 24
      %v974 = vld [vmem:[%s973] sm:$0xf]
      %v983 = vunpack.c.l.b16 %v965
      %v984 = vunpack.c.l.b16 %v966
      %v985 = vunpack.c.l.b16 %v967
      %v986 = vunpack.c.l.b16 %v968
      %v987 = vunpack.c.l.b16 %v969
      %v988 = vunpack.c.l.b16 %v970
      %v989 = vunpack.c.l.b16 %v971
      %v990 = vunpack.c.l.b16 %v972
      %v991 = vpack.c.b16 %v984, %v983
      %v992 = vpack.c.b16 %v986, %v985
      %v993 = vpack.c.b16 %v988, %v987
      %v994 = vpack.c.b16 %v990, %v989
      %v996 = vsel %vm301, %v974, 0
      %v999 = vsel %vm301, %v991, 0
      %v1002 = vsel %vm301, %v992, 0
      %v1005 = vsel %vm301, %v993, 0
      %v1008 = vsel %vm301, %v994, 0
      %1010 = vmatprep.subr.bf16.mxu0 0
      %1011 = vmatpush1.bf16.xpose.msra.mxu0 0
      %1012 = vmatprep.subr.bf16.mxu0 0
      %1013 = vmatpush1.bf16.xpose.msra.mxu0 0
      %1014 = vmatprep.subr.bf16.mxu0 0
      %1015 = vmatpush1.bf16.xpose.msra.mxu0 0
      %1016 = vmatprep.subr.bf16.mxu0 0
      %1017 = vmatpush1.bf16.xpose.msra.mxu0 0
      %1018 = vmatprep.subr.bf16.mxu0 0
      %1019 = vmatpush1.bf16.xpose.msra.mxu0 %v1008
      %1020 = vmatprep.subr.bf16.mxu0 0
      %1021 = vmatpush1.bf16.xpose.msra.mxu0 %v1005
      %1022 = vmatprep.subr.bf16.mxu0 0
      %1023 = vmatpush1.bf16.xpose.msra.mxu0 %v1002
      %1024 = vmatprep.subr.bf16.mxu0 0
      %1025 = vmatpush1.bf16.xpose.msra.mxu0 %v999
      %1026 = vmatprep.subr.bf16.mxu0 0
      %1027 = vmatpush2.bf16.xpose.msra.mxu0 0
      %1028 = vmatprep.subr.bf16.mxu0 0
      %1029 = vmatpush2.bf16.xpose.msra.mxu0 0
      %1030 = vmatprep.subr.bf16.mxu0 0
      %1031 = vmatpush2.bf16.xpose.msra.mxu0 0
      %1032 = vmatprep.subr.bf16.mxu0 0
      %1033 = vmatpush2.bf16.xpose.msra.mxu0 0
      %1034 = vmatprep.subr.bf16.mxu0 0
      %1035 = vmatpush2.bf16.xpose.msra.mxu0 0
      %1036 = vmatprep.subr.bf16.mxu0 0
      %1037 = vmatpush2.bf16.xpose.msra.mxu0 0
      %1038 = vmatprep.subr.bf16.mxu0 0
      %1039 = vmatpush2.bf16.xpose.msra.mxu0 0
      %1040 = vmatprep.subr.bf16.mxu0 0
      %1041 = vmatpush2.bf16.xpose.msra.mxu0 0
      %1042 = vmatprep.mubr.bf16.mxu0 0
      %1043 = vmatmul.mubr.bf16.gmra.mxu0 %v996
      %v1044 = vpop.f32.mrf.mxu0
      %v1045 = vadd.f32 0.0, %v1044
      %v1046 = vpop.f32.mrf.mxu0
      %v1047 = vpop.f32.mrf.mxu0
      %v1048 = vpop.f32.mrf.mxu0
      %1049 = vdwg.mxu0
      %v1050 = vadd.f32 %v963, %v1045
      %s1051 = scalar_lea.vmem %s247, 28
      %v1052 = vld [vmem:[%s1051] sm:$0xf]
      %1053 = vrot.lane.b32.xlu0 %v991, 124
      %v1054 = vpop.permute.xlu0 %1053
      %1055 = vrot.lane.b32.xlu0 %v992, 124
      %v1056 = vpop.permute.xlu0 %1055
      %1057 = vrot.lane.b32.xlu0 %v993, 124
      %v1058 = vpop.permute.xlu0 %1057
      %1059 = vrot.lane.b32.xlu0 %v994, 124
      %v1060 = vpop.permute.xlu0 %1059
      %v1062 = vsel %vm301, %v1052, 0
      %v1065 = vsel %vm301, %v1054, 0
      %v1068 = vsel %vm301, %v1056, 0
      %v1071 = vsel %vm301, %v1058, 0
      %v1074 = vsel %vm301, %v1060, 0
      %1076 = vmatprep.subr.bf16.mxu0 0
      %1077 = vmatpush1.bf16.xpose.msra.mxu0 0
      %1078 = vmatprep.subr.bf16.mxu0 0
      %1079 = vmatpush1.bf16.xpose.msra.mxu0 0
      %1080 = vmatprep.subr.bf16.mxu0 0
      %1081 = vmatpush1.bf16.xpose.msra.mxu0 0
      %1082 = vmatprep.subr.bf16.mxu0 0
      %1083 = vmatpush1.bf16.xpose.msra.mxu0 0
      %1084 = vmatprep.subr.bf16.mxu0 0
      %1085 = vmatpush1.bf16.xpose.msra.mxu0 %v1074
      %1086 = vmatprep.subr.bf16.mxu0 0
      %1087 = vmatpush1.bf16.xpose.msra.mxu0 %v1071
      %1088 = vmatprep.subr.bf16.mxu0 0
      %1089 = vmatpush1.bf16.xpose.msra.mxu0 %v1068
      %1090 = vmatprep.subr.bf16.mxu0 0
      %1091 = vmatpush1.bf16.xpose.msra.mxu0 %v1065
      %1092 = vmatprep.subr.bf16.mxu0 0
      %1093 = vmatpush2.bf16.xpose.msra.mxu0 0
      %1094 = vmatprep.subr.bf16.mxu0 0
      %1095 = vmatpush2.bf16.xpose.msra.mxu0 0
      %1096 = vmatprep.subr.bf16.mxu0 0
      %1097 = vmatpush2.bf16.xpose.msra.mxu0 0
      %1098 = vmatprep.subr.bf16.mxu0 0
      %1099 = vmatpush2.bf16.xpose.msra.mxu0 0
      %1100 = vmatprep.subr.bf16.mxu0 0
      %1101 = vmatpush2.bf16.xpose.msra.mxu0 0
      %1102 = vmatprep.subr.bf16.mxu0 0
      %1103 = vmatpush2.bf16.xpose.msra.mxu0 0
      %1104 = vmatprep.subr.bf16.mxu0 0
      %1105 = vmatpush2.bf16.xpose.msra.mxu0 0
      %1106 = vmatprep.subr.bf16.mxu0 0
      %1107 = vmatpush2.bf16.xpose.msra.mxu0 0
      %1108 = vmatprep.mubr.bf16.mxu0 0
      %1109 = vmatmul.mubr.bf16.gmra.mxu0 %v1062
      %v1110 = vpop.f32.mrf.mxu0
      %v1111 = vadd.f32 0.0, %v1110
      %v1112 = vpop.f32.mrf.mxu0
      %v1113 = vpop.f32.mrf.mxu0
      %v1114 = vpop.f32.mrf.mxu0
      %1115 = vdwg.mxu0
      %v1116 = vadd.f32 %v1050, %v1111
      %v1117 = vld [vmem:[%s964] sm:$0xf]
      %v1118 = vld [vmem:[%s964 + $0x4] sm:$0x1]
      %v1119 = vld [vmem:[%s964 + $0x10] sm:$0xf]
      %v1120 = vld [vmem:[%s964 + $0x14] sm:$0x1]
      %v1121 = vld [vmem:[%s964 + $0x20] sm:$0xf]
      %v1122 = vld [vmem:[%s964 + $0x24] sm:$0x1]
      %v1123 = vld [vmem:[%s964 + $0x30] sm:$0xf]
      %v1124 = vld [vmem:[%s964 + $0x34] sm:$0x1]
      %v1125 = vld [vmem:[%s964 + $0x40] sm:$0xf]
      %v1126 = vld [vmem:[%s964 + $0x44] sm:$0x1]
      %v1127 = vld [vmem:[%s964 + $0x50] sm:$0xf]
      %v1128 = vld [vmem:[%s964 + $0x54] sm:$0x1]
      %v1129 = vld [vmem:[%s964 + $0x60] sm:$0xf]
      %v1130 = vld [vmem:[%s964 + $0x64] sm:$0x1]
      %v1131 = vld [vmem:[%s964 + $0x70] sm:$0xf]
      %v1132 = vld [vmem:[%s964 + $0x74] sm:$0x1]
      %v1134 = vshrl.u32 %v1117, 16
      %v1136 = vrot.slane %v1134, 4
      %v1137 = vshll.u32 %v1117, 16
      %v1139 = vrot.slane %v1137, 5
      %v1140 = vor.u32 %v1136, %v1139
      %v1141 = vrot.slane %v1140, 4
      %v1143 = vshll.u32 %v1118, 16
      %v1145 = vrot.slane %v1143, 5
      %v1146 = vsel %vm430, %v1141, %v1145
      %v1148 = vshrl.u32 %v1119, 16
      %v1150 = vrot.slane %v1148, 4
      %v1151 = vshll.u32 %v1119, 16
      %v1153 = vrot.slane %v1151, 5
      %v1154 = vor.u32 %v1150, %v1153
      %v1155 = vrot.slane %v1154, 4
      %v1157 = vshll.u32 %v1120, 16
      %v1159 = vrot.slane %v1157, 5
      %v1160 = vsel %vm430, %v1155, %v1159
      %v1162 = vshrl.u32 %v1121, 16
      %v1164 = vrot.slane %v1162, 4
      %v1165 = vshll.u32 %v1121, 16
      %v1167 = vrot.slane %v1165, 5
      %v1168 = vor.u32 %v1164, %v1167
      %v1169 = vrot.slane %v1168, 4
      %v1171 = vshll.u32 %v1122, 16
      %v1173 = vrot.slane %v1171, 5
      %v1174 = vsel %vm430, %v1169, %v1173
      %v1176 = vshrl.u32 %v1123, 16
      %v1178 = vrot.slane %v1176, 4
      %v1179 = vshll.u32 %v1123, 16
      %v1181 = vrot.slane %v1179, 5
      %v1182 = vor.u32 %v1178, %v1181
      %v1183 = vrot.slane %v1182, 4
      %v1185 = vshll.u32 %v1124, 16
      %v1187 = vrot.slane %v1185, 5
      %v1188 = vsel %vm430, %v1183, %v1187
      %v1190 = vshrl.u32 %v1125, 16
      %v1192 = vrot.slane %v1190, 4
      %v1193 = vshll.u32 %v1125, 16
      %v1195 = vrot.slane %v1193, 5
      %v1196 = vor.u32 %v1192, %v1195
      %v1197 = vrot.slane %v1196, 4
      %v1199 = vshll.u32 %v1126, 16
      %v1201 = vrot.slane %v1199, 5
      %v1202 = vsel %vm430, %v1197, %v1201
      %v1204 = vshrl.u32 %v1127, 16
      %v1206 = vrot.slane %v1204, 4
      %v1207 = vshll.u32 %v1127, 16
      %v1209 = vrot.slane %v1207, 5
      %v1210 = vor.u32 %v1206, %v1209
      %v1211 = vrot.slane %v1210, 4
      %v1213 = vshll.u32 %v1128, 16
      %v1215 = vrot.slane %v1213, 5
      %v1216 = vsel %vm430, %v1211, %v1215
      %v1218 = vshrl.u32 %v1129, 16
      %v1220 = vrot.slane %v1218, 4
      %v1221 = vshll.u32 %v1129, 16
      %v1223 = vrot.slane %v1221, 5
      %v1224 = vor.u32 %v1220, %v1223
      %v1225 = vrot.slane %v1224, 4
      %v1227 = vshll.u32 %v1130, 16
      %v1229 = vrot.slane %v1227, 5
      %v1230 = vsel %vm430, %v1225, %v1229
      %v1232 = vshrl.u32 %v1131, 16
      %v1234 = vrot.slane %v1232, 4
      %v1235 = vshll.u32 %v1131, 16
      %v1237 = vrot.slane %v1235, 5
      %v1238 = vor.u32 %v1234, %v1237
      %v1239 = vrot.slane %v1238, 4
      %v1241 = vshll.u32 %v1132, 16
      %v1243 = vrot.slane %v1241, 5
      %v1244 = vsel %vm430, %v1239, %v1243
      %s1245 = scalar_lea.vmem %s247, 32
      %v1246 = vld [vmem:[%s1245] sm:$0xf]
      %v1247 = vunpack.c.l.b16 %v1146
      %v1248 = vunpack.c.l.b16 %v1160
      %v1249 = vunpack.c.l.b16 %v1174
      %v1250 = vunpack.c.l.b16 %v1188
      %v1251 = vunpack.c.l.b16 %v1202
      %v1252 = vunpack.c.l.b16 %v1216
      %v1253 = vunpack.c.l.b16 %v1230
      %v1254 = vunpack.c.l.b16 %v1244
      %v1255 = vpack.c.b16 %v1248, %v1247
      %v1256 = vpack.c.b16 %v1250, %v1249
      %v1257 = vpack.c.b16 %v1252, %v1251
      %v1258 = vpack.c.b16 %v1254, %v1253
      %v1260 = vsel %vm301, %v1246, 0
      %v1263 = vsel %vm301, %v1255, 0
      %v1266 = vsel %vm301, %v1256, 0
      %v1269 = vsel %vm301, %v1257, 0
      %v1272 = vsel %vm301, %v1258, 0
      %1274 = vmatprep.subr.bf16.mxu0 0
      %1275 = vmatpush1.bf16.xpose.msra.mxu0 0
      %1276 = vmatprep.subr.bf16.mxu0 0
      %1277 = vmatpush1.bf16.xpose.msra.mxu0 0
      %1278 = vmatprep.subr.bf16.mxu0 0
      %1279 = vmatpush1.bf16.xpose.msra.mxu0 0
      %1280 = vmatprep.subr.bf16.mxu0 0
      %1281 = vmatpush1.bf16.xpose.msra.mxu0 0
      %1282 = vmatprep.subr.bf16.mxu0 0
      %1283 = vmatpush1.bf16.xpose.msra.mxu0 %v1272
      %1284 = vmatprep.subr.bf16.mxu0 0
      %1285 = vmatpush1.bf16.xpose.msra.mxu0 %v1269
      %1286 = vmatprep.subr.bf16.mxu0 0
      %1287 = vmatpush1.bf16.xpose.msra.mxu0 %v1266
      %1288 = vmatprep.subr.bf16.mxu0 0
      %1289 = vmatpush1.bf16.xpose.msra.mxu0 %v1263
      %1290 = vmatprep.subr.bf16.mxu0 0
      %1291 = vmatpush2.bf16.xpose.msra.mxu0 0
      %1292 = vmatprep.subr.bf16.mxu0 0
      %1293 = vmatpush2.bf16.xpose.msra.mxu0 0
      %1294 = vmatprep.subr.bf16.mxu0 0
      %1295 = vmatpush2.bf16.xpose.msra.mxu0 0
      %1296 = vmatprep.subr.bf16.mxu0 0
      %1297 = vmatpush2.bf16.xpose.msra.mxu0 0
      %1298 = vmatprep.subr.bf16.mxu0 0
      %1299 = vmatpush2.bf16.xpose.msra.mxu0 0
      %1300 = vmatprep.subr.bf16.mxu0 0
      %1301 = vmatpush2.bf16.xpose.msra.mxu0 0
      %1302 = vmatprep.subr.bf16.mxu0 0
      %1303 = vmatpush2.bf16.xpose.msra.mxu0 0
      %1304 = vmatprep.subr.bf16.mxu0 0
      %1305 = vmatpush2.bf16.xpose.msra.mxu0 0
      %1306 = vmatprep.mubr.bf16.mxu0 0
      %1307 = vmatmul.mubr.bf16.gmra.mxu0 %v1260
      %v1308 = vpop.f32.mrf.mxu0
      %v1309 = vadd.f32 0.0, %v1308
      %v1310 = vpop.f32.mrf.mxu0
      %v1311 = vpop.f32.mrf.mxu0
      %v1312 = vpop.f32.mrf.mxu0
      %1313 = vdwg.mxu0
      %v1314 = vadd.f32 %v1116, %v1309
      %v1315 = vld [vmem:[%s251] sm:$0xff]
      %1317 = vset.pattern.permute.xlu0 0
      %1318 = vperm.xlu0 %1317, %v1315
      %v1319 = vpop.permute.xlu0 %1318
      %v1321 = vadd.f32 %v1314, %v1319
      %vm1322 = vcmask 523264
      %1323 = vst.msk [vmem:[%s260] sm:$0xff] %vm1322, %v1321
      %v1324 = vld [vmem:[%s255] sm:$0xf]
      %vm1325 = vcmask 519168
      %1326 = vst.msk [vmem:[%s260 + $0x8] sm:$0xf] %vm1325, %v1324
      %p1327 = scmp.lt.s32.totalorder %s19, 1
      %s1328 = scalar_select %p1327, %s19, 1
      %s1329 = smul.addr %s1328, 2
      %s1330 = smul.addr %s1329, 8
      %s1331 = scalar_lea.vmem %s4, %s1330
      // Predicated region
      $region37: #{projection_shortcut.1} parent=35 // pred_check
        %p1332 = pneg %p149
      $region38: #{projection_shortcut.1} parent=35 // pred_check_branch
        %1334 = sbr.rel (%p1332) target = $region40
      $region39: #{projection_shortcut.1} parent=35 // pred_region
        _
      $region40: #{projection_shortcut.1} parent=35 // pred_fallthru
        _
    $region36: #{projection_shortcut.1} parent=5 // pred_fallthru
      _
    %p1335 = scmp.le.s32.totalorder 2, %s10
    // Predicated region
    $region41: #{projection_shortcut.1} parent=5 // pred_check
      %p1336 = pneg %p1335
    $region42: #{projection_shortcut.1} parent=5 // pred_check_branch
      %1338 = sbr.rel (%p1336) target = $region44
    $region43: #{projection_shortcut.1} parent=5 // pred_region
      %s1339 = ssub.s32 %s10, 2
      // Predicated region
      $region45: #{projection_shortcut.1} parent=43 // pred_check
        %p1340 = pneg %p155
      $region46: #{projection_shortcut.1} parent=43 // pred_check_branch
        %1342 = sbr.rel (%p1340) target = $region48
      $region47: #{projection_shortcut.1} parent=43 // pred_region
        %p1343 = scmp.lt.s32.totalorder %s21, 1
        %s1344 = scalar_select %p1343, %s21, 1
        %s1345 = smul.addr %s1344, 2
        %s1346 = smul.addr %s1345, 8
        %s1347 = scalar_lea.vmem %s4, %s1346
      $region48: #{projection_shortcut.1} parent=43 // pred_fallthru
        _
    $region44: #{projection_shortcut.1} parent=5 // pred_fallthru
      _
  $region6: #{projection_shortcut.1} parent=0 // loop_footer
    %s14 = sadd.s32 1, %s10
  $region7: #{projection_shortcut.1} parent=0 // loop_footer_branch
    %9 = sbr.rel target = $region3
  $region8: #{projection_shortcut.1} parent=0 // loop_exit
    _

</llo_original>
